<compile_context>
chip_gen: v5e
topology: v5e:2x2
jax: 0.10.0
libtpu: 0.0.40
codegen_flags: <defaults>
</compile_context>

<pallas_src>
import functools

import jax
import jax.numpy as jnp
from jax.experimental import pallas as pl
from jax.experimental.pallas import tpu as pltpu

LANES = 128           # lane width: output / row padding granularity
MAX_TILE_ROWS = 4096  # rows per grid step (3+1 f32/row -> ~64 KiB/tile)
HIDDEN = 16
FEATURES = 3


def _round_up(n, m):
    return ((n + m - 1) // m) * m


def _mlp_kernel(x_ref, w1_ref, b1_ref, w2_ref, b2_ref, o_ref):
    """x_ref: (3, T) VMEM, rows on lanes.  o_ref: (1, T) VMEM.

    w1_ref: (3, 16) SMEM, b1_ref: (16,) SMEM, w2_ref: (16,) SMEM,
    b2_ref: (1,) SMEM.  Everything runs on the VPU (scalar-broadcast FMA);
    the MXU is intentionally not used for these degenerate matmuls.
    """
    x0 = x_ref[0:1, :]
    x1 = x_ref[1:2, :]
    x2 = x_ref[2:3, :]

    acc = jnp.zeros(o_ref.shape, jnp.float32)
    # Unrolled (static) loop over the 16 hidden units: fc1 row + ReLU + fc2 term.
    for j in range(HIDDEN):
        h = (x0 * w1_ref[0, j]
             + x1 * w1_ref[1, j]
             + x2 * w1_ref[2, j]
             + b1_ref[j])
        h = jnp.maximum(h, 0.0)
        acc = acc + h * w2_ref[j]

    o_ref[...] = (acc + b2_ref[0]).astype(o_ref.dtype)


@functools.partial(jax.jit, static_argnames=())
def net_forward(x, w1, b1, w2, b2):
    """Pallas equivalent of Net.forward.

    x:  (B, P, 3) float32
    w1: (3, 16), b1: (16,)   [pre-transposed from PyTorch's (16, 3)]
    w2: (16, 1), b2: (1,)    [pre-transposed from PyTorch's (1, 16)]
    returns: (B, P, 1) float32
    """
    B, P, F = x.shape
    assert F == FEATURES

    n_rows = B * P
    # Row tile: multiple of 128 lanes, capped at MAX_TILE_ROWS.
    tile = min(MAX_TILE_ROWS, _round_up(n_rows, LANES))
    n_pad = _round_up(n_rows, tile)
    # If everything fits in a single tile, split it in two so the parallel
    # grid axis can shard across both TensorCores on v7x.
    if n_pad // tile == 1 and tile % (2 * LANES) == 0:
        tile //= 2
    grid = (n_pad // tile,)

    x_flat = x.reshape(n_rows, F).astype(jnp.float32)
    if n_pad != n_rows:
        x_flat = jnp.pad(x_flat, ((0, n_pad - n_rows), (0, 0)))
    # Rows on lanes: (3, n_pad).  Pure layout plumbing in the wrapper.
    x_t = x_flat.T

    smem_spec = pl.BlockSpec(memory_space=pltpu.MemorySpace.SMEM)

    out = pl.pallas_call(
        _mlp_kernel,
        out_shape=jax.ShapeDtypeStruct((1, n_pad), jnp.float32),
        grid_spec=pltpu.PrefetchScalarGridSpec(
            num_scalar_prefetch=0,
            grid=grid,
            in_specs=[
                pl.BlockSpec((F, tile), lambda i: (0, i)),  # lane-dense rows
                smem_spec,  # w1 (3, 16)   -- resident, no per-step DMA
                smem_spec,  # b1 (16,)
                smem_spec,  # w2 (16,)
                smem_spec,  # b2 (1,)
            ],
            out_specs=pl.BlockSpec((1, tile), lambda i: (0, i)),
        ),
        compiler_params=pltpu.CompilerParams(
            dimension_semantics=("parallel",),
        ),
    )(x_t, w1, b1.reshape(HIDDEN), w2.reshape(HIDDEN), b2.reshape(1))

    # Drop padded lanes before reshaping back to (B, P, 1).
    return out[0, :n_rows].reshape(B, P, 1)


def init_params(key):
    """Deterministic init mirroring nn.Linear defaults (U(-1/sqrt(fan_in), +))."""
    k1, k2, k3, k4 = jax.random.split(key, 4)
    bound1 = 1.0 / jnp.sqrt(3.0)   # fc1 fan_in = 3
    bound2 = 1.0 / jnp.sqrt(16.0)  # fc2 fan_in = 16
    # stored pre-transposed as (in, out) for x @ W
    w1 = jax.random.uniform(k1, (3, 16), jnp.float32, -bound1, bound1)
    b1 = jax.random.uniform(k2, (16,), jnp.float32, -bound1, bound1)
    w2 = jax.random.uniform(k3, (16, 1), jnp.float32, -bound2, bound2)
    b2 = jax.random.uniform(k4, (1,), jnp.float32, -bound2, bound2)
    return w1, b1, w2, b2


# TODO(synk): training loop (fit/validation), data loading and tensorboard
# plotting from the original module are host-side and not kernel work; only
# the forward pass is implemented here.

if __name__ == "__main__":
    key = jax.random.PRNGKey(0)
    kx, kp = jax.random.split(key)

    # Small shapes consistent with the training pipeline:
    # batch=2, particleLimit=200, features=3  -> 400 rows (exercises padding
    # to 512 lanes and a 2-step parallel grid).
    x = jax.random.normal(kx, (2, 200, 3), jnp.float32)
    w1, b1, w2, b2 = init_params(kp)

    out = net_forward(x, w1, b1, w2, b2)
    out = jax.block_until_ready(out)

    # reference check in plain JAX
    ref = jnp.maximum(x @ w1 + b1, 0.0) @ w2 + b2
    assert out.shape == (2, 200, 1), out.shape
    assert jnp.allclose(out, ref, atol=1e-5, rtol=1e-5), "mismatch vs reference"

    print("KERNEL_OK")
</pallas_src>

<mosaic_0001>
module attributes {stable_mosaic.version = 11 : i64} {
  func.func @_mlp_kernel(%arg0: i32, %arg1: memref<3x256xf32, #tpu.memory_space<vmem>>, %arg2: memref<3x16xf32, #tpu.memory_space<smem>>, %arg3: memref<16xf32, #tpu.memory_space<smem>>, %arg4: memref<16xf32, #tpu.memory_space<smem>>, %arg5: memref<1xf32, #tpu.memory_space<smem>>, %arg6: memref<1x256xf32, #tpu.memory_space<vmem>>) attributes {dimension_semantics = [#tpu.dimension_semantics<parallel>], iteration_bounds = array<i64: 2>, scalar_prefetch = 0 : i64, scratch_operands = 0 : i64, tpu.core_type = #tpu.core_type<tc>, window_params = [{transform_indices = @transform_0, window_bounds = array<i64: 3, 256>}, {transform_indices = @transform_1, window_bounds = array<i64: 3, 16>}, {transform_indices = @transform_2, window_bounds = array<i64: 16>}, {transform_indices = @transform_3, window_bounds = array<i64: 16>}, {transform_indices = @transform_4, window_bounds = array<i64: 1>}, {transform_indices = @transform_5, window_bounds = array<i64: 1, 256>}]} {
    %c0 = arith.constant 0 : index
    %c0_0 = arith.constant 0 : index
    %0 = vector.load %arg1[%c0, %c0_0] : memref<3x256xf32, #tpu.memory_space<vmem>>, vector<1x256xf32>
    %c1 = arith.constant 1 : index
    %c0_1 = arith.constant 0 : index
    %1 = vector.load %arg1[%c1, %c0_1] : memref<3x256xf32, #tpu.memory_space<vmem>>, vector<1x256xf32>
    %c2 = arith.constant 2 : index
    %c0_2 = arith.constant 0 : index
    %2 = vector.load %arg1[%c2, %c0_2] : memref<3x256xf32, #tpu.memory_space<vmem>>, vector<1x256xf32>
    %cst = arith.constant 0.000000e+00 : f32
    %3 = vector.broadcast %cst : f32 to vector<1x256xf32>
    %c0_3 = arith.constant 0 : index
    %c0_4 = arith.constant 0 : index
    %4 = memref.load %arg2[%c0_3, %c0_4] : memref<3x16xf32, #tpu.memory_space<smem>>
    %5 = vector.broadcast %4 : f32 to vector<1x256xf32>
    %6 = arith.mulf %0, %5 : vector<1x256xf32>
    %c1_5 = arith.constant 1 : index
    %c0_6 = arith.constant 0 : index
    %7 = memref.load %arg2[%c1_5, %c0_6] : memref<3x16xf32, #tpu.memory_space<smem>>
    %8 = vector.broadcast %7 : f32 to vector<1x256xf32>
    %9 = arith.mulf %1, %8 : vector<1x256xf32>
    %10 = arith.addf %6, %9 : vector<1x256xf32>
    %c2_7 = arith.constant 2 : index
    %c0_8 = arith.constant 0 : index
    %11 = memref.load %arg2[%c2_7, %c0_8] : memref<3x16xf32, #tpu.memory_space<smem>>
    %12 = vector.broadcast %11 : f32 to vector<1x256xf32>
    %13 = arith.mulf %2, %12 : vector<1x256xf32>
    %14 = arith.addf %10, %13 : vector<1x256xf32>
    %c0_9 = arith.constant 0 : index
    %15 = memref.load %arg3[%c0_9] : memref<16xf32, #tpu.memory_space<smem>>
    %16 = vector.broadcast %15 : f32 to vector<1x256xf32>
    %17 = arith.addf %14, %16 : vector<1x256xf32>
    %cst_10 = arith.constant 0.000000e+00 : f32
    %18 = vector.broadcast %cst_10 : f32 to vector<1x256xf32>
    %19 = arith.maximumf %17, %18 : vector<1x256xf32>
    %c0_11 = arith.constant 0 : index
    %20 = memref.load %arg4[%c0_11] : memref<16xf32, #tpu.memory_space<smem>>
    %21 = vector.broadcast %20 : f32 to vector<1x256xf32>
    %22 = arith.mulf %19, %21 : vector<1x256xf32>
    %23 = arith.addf %3, %22 : vector<1x256xf32>
    %c0_12 = arith.constant 0 : index
    %c1_13 = arith.constant 1 : index
    %24 = memref.load %arg2[%c0_12, %c1_13] : memref<3x16xf32, #tpu.memory_space<smem>>
    %25 = vector.broadcast %24 : f32 to vector<1x256xf32>
    %26 = arith.mulf %0, %25 : vector<1x256xf32>
    %c1_14 = arith.constant 1 : index
    %c1_15 = arith.constant 1 : index
    %27 = memref.load %arg2[%c1_14, %c1_15] : memref<3x16xf32, #tpu.memory_space<smem>>
    %28 = vector.broadcast %27 : f32 to vector<1x256xf32>
    %29 = arith.mulf %1, %28 : vector<1x256xf32>
    %30 = arith.addf %26, %29 : vector<1x256xf32>
    %c2_16 = arith.constant 2 : index
    %c1_17 = arith.constant 1 : index
    %31 = memref.load %arg2[%c2_16, %c1_17] : memref<3x16xf32, #tpu.memory_space<smem>>
    %32 = vector.broadcast %31 : f32 to vector<1x256xf32>
    %33 = arith.mulf %2, %32 : vector<1x256xf32>
    %34 = arith.addf %30, %33 : vector<1x256xf32>
    %c1_18 = arith.constant 1 : index
    %35 = memref.load %arg3[%c1_18] : memref<16xf32, #tpu.memory_space<smem>>
    %36 = vector.broadcast %35 : f32 to vector<1x256xf32>
    %37 = arith.addf %34, %36 : vector<1x256xf32>
    %cst_19 = arith.constant 0.000000e+00 : f32
    %38 = vector.broadcast %cst_19 : f32 to vector<1x256xf32>
    %39 = arith.maximumf %37, %38 : vector<1x256xf32>
    %c1_20 = arith.constant 1 : index
    %40 = memref.load %arg4[%c1_20] : memref<16xf32, #tpu.memory_space<smem>>
    %41 = vector.broadcast %40 : f32 to vector<1x256xf32>
    %42 = arith.mulf %39, %41 : vector<1x256xf32>
    %43 = arith.addf %23, %42 : vector<1x256xf32>
    %c0_21 = arith.constant 0 : index
    %c2_22 = arith.constant 2 : index
    %44 = memref.load %arg2[%c0_21, %c2_22] : memref<3x16xf32, #tpu.memory_space<smem>>
    %45 = vector.broadcast %44 : f32 to vector<1x256xf32>
    %46 = arith.mulf %0, %45 : vector<1x256xf32>
    %c1_23 = arith.constant 1 : index
    %c2_24 = arith.constant 2 : index
    %47 = memref.load %arg2[%c1_23, %c2_24] : memref<3x16xf32, #tpu.memory_space<smem>>
    %48 = vector.broadcast %47 : f32 to vector<1x256xf32>
    %49 = arith.mulf %1, %48 : vector<1x256xf32>
    %50 = arith.addf %46, %49 : vector<1x256xf32>
    %c2_25 = arith.constant 2 : index
    %c2_26 = arith.constant 2 : index
    %51 = memref.load %arg2[%c2_25, %c2_26] : memref<3x16xf32, #tpu.memory_space<smem>>
    %52 = vector.broadcast %51 : f32 to vector<1x256xf32>
    %53 = arith.mulf %2, %52 : vector<1x256xf32>
    %54 = arith.addf %50, %53 : vector<1x256xf32>
    %c2_27 = arith.constant 2 : index
    %55 = memref.load %arg3[%c2_27] : memref<16xf32, #tpu.memory_space<smem>>
    %56 = vector.broadcast %55 : f32 to vector<1x256xf32>
    %57 = arith.addf %54, %56 : vector<1x256xf32>
    %cst_28 = arith.constant 0.000000e+00 : f32
    %58 = vector.broadcast %cst_28 : f32 to vector<1x256xf32>
    %59 = arith.maximumf %57, %58 : vector<1x256xf32>
    %c2_29 = arith.constant 2 : index
    %60 = memref.load %arg4[%c2_29] : memref<16xf32, #tpu.memory_space<smem>>
    %61 = vector.broadcast %60 : f32 to vector<1x256xf32>
    %62 = arith.mulf %59, %61 : vector<1x256xf32>
    %63 = arith.addf %43, %62 : vector<1x256xf32>
    %c0_30 = arith.constant 0 : index
    %c3 = arith.constant 3 : index
    %64 = memref.load %arg2[%c0_30, %c3] : memref<3x16xf32, #tpu.memory_space<smem>>
    %65 = vector.broadcast %64 : f32 to vector<1x256xf32>
    %66 = arith.mulf %0, %65 : vector<1x256xf32>
    %c1_31 = arith.constant 1 : index
    %c3_32 = arith.constant 3 : index
    %67 = memref.load %arg2[%c1_31, %c3_32] : memref<3x16xf32, #tpu.memory_space<smem>>
    %68 = vector.broadcast %67 : f32 to vector<1x256xf32>
    %69 = arith.mulf %1, %68 : vector<1x256xf32>
    %70 = arith.addf %66, %69 : vector<1x256xf32>
    %c2_33 = arith.constant 2 : index
    %c3_34 = arith.constant 3 : index
    %71 = memref.load %arg2[%c2_33, %c3_34] : memref<3x16xf32, #tpu.memory_space<smem>>
    %72 = vector.broadcast %71 : f32 to vector<1x256xf32>
    %73 = arith.mulf %2, %72 : vector<1x256xf32>
    %74 = arith.addf %70, %73 : vector<1x256xf32>
    %c3_35 = arith.constant 3 : index
    %75 = memref.load %arg3[%c3_35] : memref<16xf32, #tpu.memory_space<smem>>
    %76 = vector.broadcast %75 : f32 to vector<1x256xf32>
    %77 = arith.addf %74, %76 : vector<1x256xf32>
    %cst_36 = arith.constant 0.000000e+00 : f32
    %78 = vector.broadcast %cst_36 : f32 to vector<1x256xf32>
    %79 = arith.maximumf %77, %78 : vector<1x256xf32>
    %c3_37 = arith.constant 3 : index
    %80 = memref.load %arg4[%c3_37] : memref<16xf32, #tpu.memory_space<smem>>
    %81 = vector.broadcast %80 : f32 to vector<1x256xf32>
    %82 = arith.mulf %79, %81 : vector<1x256xf32>
    %83 = arith.addf %63, %82 : vector<1x256xf32>
    %c0_38 = arith.constant 0 : index
    %c4 = arith.constant 4 : index
    %84 = memref.load %arg2[%c0_38, %c4] : memref<3x16xf32, #tpu.memory_space<smem>>
    %85 = vector.broadcast %84 : f32 to vector<1x256xf32>
    %86 = arith.mulf %0, %85 : vector<1x256xf32>
    %c1_39 = arith.constant 1 : index
    %c4_40 = arith.constant 4 : index
    %87 = memref.load %arg2[%c1_39, %c4_40] : memref<3x16xf32, #tpu.memory_space<smem>>
    %88 = vector.broadcast %87 : f32 to vector<1x256xf32>
    %89 = arith.mulf %1, %88 : vector<1x256xf32>
    %90 = arith.addf %86, %89 : vector<1x256xf32>
    %c2_41 = arith.constant 2 : index
    %c4_42 = arith.constant 4 : index
    %91 = memref.load %arg2[%c2_41, %c4_42] : memref<3x16xf32, #tpu.memory_space<smem>>
    %92 = vector.broadcast %91 : f32 to vector<1x256xf32>
    %93 = arith.mulf %2, %92 : vector<1x256xf32>
    %94 = arith.addf %90, %93 : vector<1x256xf32>
    %c4_43 = arith.constant 4 : index
    %95 = memref.load %arg3[%c4_43] : memref<16xf32, #tpu.memory_space<smem>>
    %96 = vector.broadcast %95 : f32 to vector<1x256xf32>
    %97 = arith.addf %94, %96 : vector<1x256xf32>
    %cst_44 = arith.constant 0.000000e+00 : f32
    %98 = vector.broadcast %cst_44 : f32 to vector<1x256xf32>
    %99 = arith.maximumf %97, %98 : vector<1x256xf32>
    %c4_45 = arith.constant 4 : index
    %100 = memref.load %arg4[%c4_45] : memref<16xf32, #tpu.memory_space<smem>>
    %101 = vector.broadcast %100 : f32 to vector<1x256xf32>
    %102 = arith.mulf %99, %101 : vector<1x256xf32>
    %103 = arith.addf %83, %102 : vector<1x256xf32>
    %c0_46 = arith.constant 0 : index
    %c5 = arith.constant 5 : index
    %104 = memref.load %arg2[%c0_46, %c5] : memref<3x16xf32, #tpu.memory_space<smem>>
    %105 = vector.broadcast %104 : f32 to vector<1x256xf32>
    %106 = arith.mulf %0, %105 : vector<1x256xf32>
    %c1_47 = arith.constant 1 : index
    %c5_48 = arith.constant 5 : index
    %107 = memref.load %arg2[%c1_47, %c5_48] : memref<3x16xf32, #tpu.memory_space<smem>>
    %108 = vector.broadcast %107 : f32 to vector<1x256xf32>
    %109 = arith.mulf %1, %108 : vector<1x256xf32>
    %110 = arith.addf %106, %109 : vector<1x256xf32>
    %c2_49 = arith.constant 2 : index
    %c5_50 = arith.constant 5 : index
    %111 = memref.load %arg2[%c2_49, %c5_50] : memref<3x16xf32, #tpu.memory_space<smem>>
    %112 = vector.broadcast %111 : f32 to vector<1x256xf32>
    %113 = arith.mulf %2, %112 : vector<1x256xf32>
    %114 = arith.addf %110, %113 : vector<1x256xf32>
    %c5_51 = arith.constant 5 : index
    %115 = memref.load %arg3[%c5_51] : memref<16xf32, #tpu.memory_space<smem>>
    %116 = vector.broadcast %115 : f32 to vector<1x256xf32>
    %117 = arith.addf %114, %116 : vector<1x256xf32>
    %cst_52 = arith.constant 0.000000e+00 : f32
    %118 = vector.broadcast %cst_52 : f32 to vector<1x256xf32>
    %119 = arith.maximumf %117, %118 : vector<1x256xf32>
    %c5_53 = arith.constant 5 : index
    %120 = memref.load %arg4[%c5_53] : memref<16xf32, #tpu.memory_space<smem>>
    %121 = vector.broadcast %120 : f32 to vector<1x256xf32>
    %122 = arith.mulf %119, %121 : vector<1x256xf32>
    %123 = arith.addf %103, %122 : vector<1x256xf32>
    %c0_54 = arith.constant 0 : index
    %c6 = arith.constant 6 : index
    %124 = memref.load %arg2[%c0_54, %c6] : memref<3x16xf32, #tpu.memory_space<smem>>
    %125 = vector.broadcast %124 : f32 to vector<1x256xf32>
    %126 = arith.mulf %0, %125 : vector<1x256xf32>
    %c1_55 = arith.constant 1 : index
    %c6_56 = arith.constant 6 : index
    %127 = memref.load %arg2[%c1_55, %c6_56] : memref<3x16xf32, #tpu.memory_space<smem>>
    %128 = vector.broadcast %127 : f32 to vector<1x256xf32>
    %129 = arith.mulf %1, %128 : vector<1x256xf32>
    %130 = arith.addf %126, %129 : vector<1x256xf32>
    %c2_57 = arith.constant 2 : index
    %c6_58 = arith.constant 6 : index
    %131 = memref.load %arg2[%c2_57, %c6_58] : memref<3x16xf32, #tpu.memory_space<smem>>
    %132 = vector.broadcast %131 : f32 to vector<1x256xf32>
    %133 = arith.mulf %2, %132 : vector<1x256xf32>
    %134 = arith.addf %130, %133 : vector<1x256xf32>
    %c6_59 = arith.constant 6 : index
    %135 = memref.load %arg3[%c6_59] : memref<16xf32, #tpu.memory_space<smem>>
    %136 = vector.broadcast %135 : f32 to vector<1x256xf32>
    %137 = arith.addf %134, %136 : vector<1x256xf32>
    %cst_60 = arith.constant 0.000000e+00 : f32
    %138 = vector.broadcast %cst_60 : f32 to vector<1x256xf32>
    %139 = arith.maximumf %137, %138 : vector<1x256xf32>
    %c6_61 = arith.constant 6 : index
    %140 = memref.load %arg4[%c6_61] : memref<16xf32, #tpu.memory_space<smem>>
    %141 = vector.broadcast %140 : f32 to vector<1x256xf32>
    %142 = arith.mulf %139, %141 : vector<1x256xf32>
    %143 = arith.addf %123, %142 : vector<1x256xf32>
    %c0_62 = arith.constant 0 : index
    %c7 = arith.constant 7 : index
    %144 = memref.load %arg2[%c0_62, %c7] : memref<3x16xf32, #tpu.memory_space<smem>>
    %145 = vector.broadcast %144 : f32 to vector<1x256xf32>
    %146 = arith.mulf %0, %145 : vector<1x256xf32>
    %c1_63 = arith.constant 1 : index
    %c7_64 = arith.constant 7 : index
    %147 = memref.load %arg2[%c1_63, %c7_64] : memref<3x16xf32, #tpu.memory_space<smem>>
    %148 = vector.broadcast %147 : f32 to vector<1x256xf32>
    %149 = arith.mulf %1, %148 : vector<1x256xf32>
    %150 = arith.addf %146, %149 : vector<1x256xf32>
    %c2_65 = arith.constant 2 : index
    %c7_66 = arith.constant 7 : index
    %151 = memref.load %arg2[%c2_65, %c7_66] : memref<3x16xf32, #tpu.memory_space<smem>>
    %152 = vector.broadcast %151 : f32 to vector<1x256xf32>
    %153 = arith.mulf %2, %152 : vector<1x256xf32>
    %154 = arith.addf %150, %153 : vector<1x256xf32>
    %c7_67 = arith.constant 7 : index
    %155 = memref.load %arg3[%c7_67] : memref<16xf32, #tpu.memory_space<smem>>
    %156 = vector.broadcast %155 : f32 to vector<1x256xf32>
    %157 = arith.addf %154, %156 : vector<1x256xf32>
    %cst_68 = arith.constant 0.000000e+00 : f32
    %158 = vector.broadcast %cst_68 : f32 to vector<1x256xf32>
    %159 = arith.maximumf %157, %158 : vector<1x256xf32>
    %c7_69 = arith.constant 7 : index
    %160 = memref.load %arg4[%c7_69] : memref<16xf32, #tpu.memory_space<smem>>
    %161 = vector.broadcast %160 : f32 to vector<1x256xf32>
    %162 = arith.mulf %159, %161 : vector<1x256xf32>
    %163 = arith.addf %143, %162 : vector<1x256xf32>
    %c0_70 = arith.constant 0 : index
    %c8 = arith.constant 8 : index
    %164 = memref.load %arg2[%c0_70, %c8] : memref<3x16xf32, #tpu.memory_space<smem>>
    %165 = vector.broadcast %164 : f32 to vector<1x256xf32>
    %166 = arith.mulf %0, %165 : vector<1x256xf32>
    %c1_71 = arith.constant 1 : index
    %c8_72 = arith.constant 8 : index
    %167 = memref.load %arg2[%c1_71, %c8_72] : memref<3x16xf32, #tpu.memory_space<smem>>
    %168 = vector.broadcast %167 : f32 to vector<1x256xf32>
    %169 = arith.mulf %1, %168 : vector<1x256xf32>
    %170 = arith.addf %166, %169 : vector<1x256xf32>
    %c2_73 = arith.constant 2 : index
    %c8_74 = arith.constant 8 : index
    %171 = memref.load %arg2[%c2_73, %c8_74] : memref<3x16xf32, #tpu.memory_space<smem>>
    %172 = vector.broadcast %171 : f32 to vector<1x256xf32>
    %173 = arith.mulf %2, %172 : vector<1x256xf32>
    %174 = arith.addf %170, %173 : vector<1x256xf32>
    %c8_75 = arith.constant 8 : index
    %175 = memref.load %arg3[%c8_75] : memref<16xf32, #tpu.memory_space<smem>>
    %176 = vector.broadcast %175 : f32 to vector<1x256xf32>
    %177 = arith.addf %174, %176 : vector<1x256xf32>
    %cst_76 = arith.constant 0.000000e+00 : f32
    %178 = vector.broadcast %cst_76 : f32 to vector<1x256xf32>
    %179 = arith.maximumf %177, %178 : vector<1x256xf32>
    %c8_77 = arith.constant 8 : index
    %180 = memref.load %arg4[%c8_77] : memref<16xf32, #tpu.memory_space<smem>>
    %181 = vector.broadcast %180 : f32 to vector<1x256xf32>
    %182 = arith.mulf %179, %181 : vector<1x256xf32>
    %183 = arith.addf %163, %182 : vector<1x256xf32>
    %c0_78 = arith.constant 0 : index
    %c9 = arith.constant 9 : index
    %184 = memref.load %arg2[%c0_78, %c9] : memref<3x16xf32, #tpu.memory_space<smem>>
    %185 = vector.broadcast %184 : f32 to vector<1x256xf32>
    %186 = arith.mulf %0, %185 : vector<1x256xf32>
    %c1_79 = arith.constant 1 : index
    %c9_80 = arith.constant 9 : index
    %187 = memref.load %arg2[%c1_79, %c9_80] : memref<3x16xf32, #tpu.memory_space<smem>>
    %188 = vector.broadcast %187 : f32 to vector<1x256xf32>
    %189 = arith.mulf %1, %188 : vector<1x256xf32>
    %190 = arith.addf %186, %189 : vector<1x256xf32>
    %c2_81 = arith.constant 2 : index
    %c9_82 = arith.constant 9 : index
    %191 = memref.load %arg2[%c2_81, %c9_82] : memref<3x16xf32, #tpu.memory_space<smem>>
    %192 = vector.broadcast %191 : f32 to vector<1x256xf32>
    %193 = arith.mulf %2, %192 : vector<1x256xf32>
    %194 = arith.addf %190, %193 : vector<1x256xf32>
    %c9_83 = arith.constant 9 : index
    %195 = memref.load %arg3[%c9_83] : memref<16xf32, #tpu.memory_space<smem>>
    %196 = vector.broadcast %195 : f32 to vector<1x256xf32>
    %197 = arith.addf %194, %196 : vector<1x256xf32>
    %cst_84 = arith.constant 0.000000e+00 : f32
    %198 = vector.broadcast %cst_84 : f32 to vector<1x256xf32>
    %199 = arith.maximumf %197, %198 : vector<1x256xf32>
    %c9_85 = arith.constant 9 : index
    %200 = memref.load %arg4[%c9_85] : memref<16xf32, #tpu.memory_space<smem>>
    %201 = vector.broadcast %200 : f32 to vector<1x256xf32>
    %202 = arith.mulf %199, %201 : vector<1x256xf32>
    %203 = arith.addf %183, %202 : vector<1x256xf32>
    %c0_86 = arith.constant 0 : index
    %c10 = arith.constant 10 : index
    %204 = memref.load %arg2[%c0_86, %c10] : memref<3x16xf32, #tpu.memory_space<smem>>
    %205 = vector.broadcast %204 : f32 to vector<1x256xf32>
    %206 = arith.mulf %0, %205 : vector<1x256xf32>
    %c1_87 = arith.constant 1 : index
    %c10_88 = arith.constant 10 : index
    %207 = memref.load %arg2[%c1_87, %c10_88] : memref<3x16xf32, #tpu.memory_space<smem>>
    %208 = vector.broadcast %207 : f32 to vector<1x256xf32>
    %209 = arith.mulf %1, %208 : vector<1x256xf32>
    %210 = arith.addf %206, %209 : vector<1x256xf32>
    %c2_89 = arith.constant 2 : index
    %c10_90 = arith.constant 10 : index
    %211 = memref.load %arg2[%c2_89, %c10_90] : memref<3x16xf32, #tpu.memory_space<smem>>
    %212 = vector.broadcast %211 : f32 to vector<1x256xf32>
    %213 = arith.mulf %2, %212 : vector<1x256xf32>
    %214 = arith.addf %210, %213 : vector<1x256xf32>
    %c10_91 = arith.constant 10 : index
    %215 = memref.load %arg3[%c10_91] : memref<16xf32, #tpu.memory_space<smem>>
    %216 = vector.broadcast %215 : f32 to vector<1x256xf32>
    %217 = arith.addf %214, %216 : vector<1x256xf32>
    %cst_92 = arith.constant 0.000000e+00 : f32
    %218 = vector.broadcast %cst_92 : f32 to vector<1x256xf32>
    %219 = arith.maximumf %217, %218 : vector<1x256xf32>
    %c10_93 = arith.constant 10 : index
    %220 = memref.load %arg4[%c10_93] : memref<16xf32, #tpu.memory_space<smem>>
    %221 = vector.broadcast %220 : f32 to vector<1x256xf32>
    %222 = arith.mulf %219, %221 : vector<1x256xf32>
    %223 = arith.addf %203, %222 : vector<1x256xf32>
    %c0_94 = arith.constant 0 : index
    %c11 = arith.constant 11 : index
    %224 = memref.load %arg2[%c0_94, %c11] : memref<3x16xf32, #tpu.memory_space<smem>>
    %225 = vector.broadcast %224 : f32 to vector<1x256xf32>
    %226 = arith.mulf %0, %225 : vector<1x256xf32>
    %c1_95 = arith.constant 1 : index
    %c11_96 = arith.constant 11 : index
    %227 = memref.load %arg2[%c1_95, %c11_96] : memref<3x16xf32, #tpu.memory_space<smem>>
    %228 = vector.broadcast %227 : f32 to vector<1x256xf32>
    %229 = arith.mulf %1, %228 : vector<1x256xf32>
    %230 = arith.addf %226, %229 : vector<1x256xf32>
    %c2_97 = arith.constant 2 : index
    %c11_98 = arith.constant 11 : index
    %231 = memref.load %arg2[%c2_97, %c11_98] : memref<3x16xf32, #tpu.memory_space<smem>>
    %232 = vector.broadcast %231 : f32 to vector<1x256xf32>
    %233 = arith.mulf %2, %232 : vector<1x256xf32>
    %234 = arith.addf %230, %233 : vector<1x256xf32>
    %c11_99 = arith.constant 11 : index
    %235 = memref.load %arg3[%c11_99] : memref<16xf32, #tpu.memory_space<smem>>
    %236 = vector.broadcast %235 : f32 to vector<1x256xf32>
    %237 = arith.addf %234, %236 : vector<1x256xf32>
    %cst_100 = arith.constant 0.000000e+00 : f32
    %238 = vector.broadcast %cst_100 : f32 to vector<1x256xf32>
    %239 = arith.maximumf %237, %238 : vector<1x256xf32>
    %c11_101 = arith.constant 11 : index
    %240 = memref.load %arg4[%c11_101] : memref<16xf32, #tpu.memory_space<smem>>
    %241 = vector.broadcast %240 : f32 to vector<1x256xf32>
    %242 = arith.mulf %239, %241 : vector<1x256xf32>
    %243 = arith.addf %223, %242 : vector<1x256xf32>
    %c0_102 = arith.constant 0 : index
    %c12 = arith.constant 12 : index
    %244 = memref.load %arg2[%c0_102, %c12] : memref<3x16xf32, #tpu.memory_space<smem>>
    %245 = vector.broadcast %244 : f32 to vector<1x256xf32>
    %246 = arith.mulf %0, %245 : vector<1x256xf32>
    %c1_103 = arith.constant 1 : index
    %c12_104 = arith.constant 12 : index
    %247 = memref.load %arg2[%c1_103, %c12_104] : memref<3x16xf32, #tpu.memory_space<smem>>
    %248 = vector.broadcast %247 : f32 to vector<1x256xf32>
    %249 = arith.mulf %1, %248 : vector<1x256xf32>
    %250 = arith.addf %246, %249 : vector<1x256xf32>
    %c2_105 = arith.constant 2 : index
    %c12_106 = arith.constant 12 : index
    %251 = memref.load %arg2[%c2_105, %c12_106] : memref<3x16xf32, #tpu.memory_space<smem>>
    %252 = vector.broadcast %251 : f32 to vector<1x256xf32>
    %253 = arith.mulf %2, %252 : vector<1x256xf32>
    %254 = arith.addf %250, %253 : vector<1x256xf32>
    %c12_107 = arith.constant 12 : index
    %255 = memref.load %arg3[%c12_107] : memref<16xf32, #tpu.memory_space<smem>>
    %256 = vector.broadcast %255 : f32 to vector<1x256xf32>
    %257 = arith.addf %254, %256 : vector<1x256xf32>
    %cst_108 = arith.constant 0.000000e+00 : f32
    %258 = vector.broadcast %cst_108 : f32 to vector<1x256xf32>
    %259 = arith.maximumf %257, %258 : vector<1x256xf32>
    %c12_109 = arith.constant 12 : index
    %260 = memref.load %arg4[%c12_109] : memref<16xf32, #tpu.memory_space<smem>>
    %261 = vector.broadcast %260 : f32 to vector<1x256xf32>
    %262 = arith.mulf %259, %261 : vector<1x256xf32>
    %263 = arith.addf %243, %262 : vector<1x256xf32>
    %c0_110 = arith.constant 0 : index
    %c13 = arith.constant 13 : index
    %264 = memref.load %arg2[%c0_110, %c13] : memref<3x16xf32, #tpu.memory_space<smem>>
    %265 = vector.broadcast %264 : f32 to vector<1x256xf32>
    %266 = arith.mulf %0, %265 : vector<1x256xf32>
    %c1_111 = arith.constant 1 : index
    %c13_112 = arith.constant 13 : index
    %267 = memref.load %arg2[%c1_111, %c13_112] : memref<3x16xf32, #tpu.memory_space<smem>>
    %268 = vector.broadcast %267 : f32 to vector<1x256xf32>
    %269 = arith.mulf %1, %268 : vector<1x256xf32>
    %270 = arith.addf %266, %269 : vector<1x256xf32>
    %c2_113 = arith.constant 2 : index
    %c13_114 = arith.constant 13 : index
    %271 = memref.load %arg2[%c2_113, %c13_114] : memref<3x16xf32, #tpu.memory_space<smem>>
    %272 = vector.broadcast %271 : f32 to vector<1x256xf32>
    %273 = arith.mulf %2, %272 : vector<1x256xf32>
    %274 = arith.addf %270, %273 : vector<1x256xf32>
    %c13_115 = arith.constant 13 : index
    %275 = memref.load %arg3[%c13_115] : memref<16xf32, #tpu.memory_space<smem>>
    %276 = vector.broadcast %275 : f32 to vector<1x256xf32>
    %277 = arith.addf %274, %276 : vector<1x256xf32>
    %cst_116 = arith.constant 0.000000e+00 : f32
    %278 = vector.broadcast %cst_116 : f32 to vector<1x256xf32>
    %279 = arith.maximumf %277, %278 : vector<1x256xf32>
    %c13_117 = arith.constant 13 : index
    %280 = memref.load %arg4[%c13_117] : memref<16xf32, #tpu.memory_space<smem>>
    %281 = vector.broadcast %280 : f32 to vector<1x256xf32>
    %282 = arith.mulf %279, %281 : vector<1x256xf32>
    %283 = arith.addf %263, %282 : vector<1x256xf32>
    %c0_118 = arith.constant 0 : index
    %c14 = arith.constant 14 : index
    %284 = memref.load %arg2[%c0_118, %c14] : memref<3x16xf32, #tpu.memory_space<smem>>
    %285 = vector.broadcast %284 : f32 to vector<1x256xf32>
    %286 = arith.mulf %0, %285 : vector<1x256xf32>
    %c1_119 = arith.constant 1 : index
    %c14_120 = arith.constant 14 : index
    %287 = memref.load %arg2[%c1_119, %c14_120] : memref<3x16xf32, #tpu.memory_space<smem>>
    %288 = vector.broadcast %287 : f32 to vector<1x256xf32>
    %289 = arith.mulf %1, %288 : vector<1x256xf32>
    %290 = arith.addf %286, %289 : vector<1x256xf32>
    %c2_121 = arith.constant 2 : index
    %c14_122 = arith.constant 14 : index
    %291 = memref.load %arg2[%c2_121, %c14_122] : memref<3x16xf32, #tpu.memory_space<smem>>
    %292 = vector.broadcast %291 : f32 to vector<1x256xf32>
    %293 = arith.mulf %2, %292 : vector<1x256xf32>
    %294 = arith.addf %290, %293 : vector<1x256xf32>
    %c14_123 = arith.constant 14 : index
    %295 = memref.load %arg3[%c14_123] : memref<16xf32, #tpu.memory_space<smem>>
    %296 = vector.broadcast %295 : f32 to vector<1x256xf32>
    %297 = arith.addf %294, %296 : vector<1x256xf32>
    %cst_124 = arith.constant 0.000000e+00 : f32
    %298 = vector.broadcast %cst_124 : f32 to vector<1x256xf32>
    %299 = arith.maximumf %297, %298 : vector<1x256xf32>
    %c14_125 = arith.constant 14 : index
    %300 = memref.load %arg4[%c14_125] : memref<16xf32, #tpu.memory_space<smem>>
    %301 = vector.broadcast %300 : f32 to vector<1x256xf32>
    %302 = arith.mulf %299, %301 : vector<1x256xf32>
    %303 = arith.addf %283, %302 : vector<1x256xf32>
    %c0_126 = arith.constant 0 : index
    %c15 = arith.constant 15 : index
    %304 = memref.load %arg2[%c0_126, %c15] : memref<3x16xf32, #tpu.memory_space<smem>>
    %305 = vector.broadcast %304 : f32 to vector<1x256xf32>
    %306 = arith.mulf %0, %305 : vector<1x256xf32>
    %c1_127 = arith.constant 1 : index
    %c15_128 = arith.constant 15 : index
    %307 = memref.load %arg2[%c1_127, %c15_128] : memref<3x16xf32, #tpu.memory_space<smem>>
    %308 = vector.broadcast %307 : f32 to vector<1x256xf32>
    %309 = arith.mulf %1, %308 : vector<1x256xf32>
    %310 = arith.addf %306, %309 : vector<1x256xf32>
    %c2_129 = arith.constant 2 : index
    %c15_130 = arith.constant 15 : index
    %311 = memref.load %arg2[%c2_129, %c15_130] : memref<3x16xf32, #tpu.memory_space<smem>>
    %312 = vector.broadcast %311 : f32 to vector<1x256xf32>
    %313 = arith.mulf %2, %312 : vector<1x256xf32>
    %314 = arith.addf %310, %313 : vector<1x256xf32>
    %c15_131 = arith.constant 15 : index
    %315 = memref.load %arg3[%c15_131] : memref<16xf32, #tpu.memory_space<smem>>
    %316 = vector.broadcast %315 : f32 to vector<1x256xf32>
    %317 = arith.addf %314, %316 : vector<1x256xf32>
    %cst_132 = arith.constant 0.000000e+00 : f32
    %318 = vector.broadcast %cst_132 : f32 to vector<1x256xf32>
    %319 = arith.maximumf %317, %318 : vector<1x256xf32>
    %c15_133 = arith.constant 15 : index
    %320 = memref.load %arg4[%c15_133] : memref<16xf32, #tpu.memory_space<smem>>
    %321 = vector.broadcast %320 : f32 to vector<1x256xf32>
    %322 = arith.mulf %319, %321 : vector<1x256xf32>
    %323 = arith.addf %303, %322 : vector<1x256xf32>
    %c0_134 = arith.constant 0 : index
    %324 = memref.load %arg5[%c0_134] : memref<1xf32, #tpu.memory_space<smem>>
    %325 = vector.broadcast %324 : f32 to vector<1x256xf32>
    %326 = arith.addf %323, %325 : vector<1x256xf32>
    %c0_135 = arith.constant 0 : index
    %c0_136 = arith.constant 0 : index
    %327 = vector.load %arg6[%c0_135, %c0_136] : memref<1x256xf32, #tpu.memory_space<vmem>>, vector<1x256xf32>
    tpu.vector_store %arg6[%c0_135, %c0_136], %326 {strides = array<i32>} : memref<1x256xf32, #tpu.memory_space<vmem>>, vector<1x256xf32>,
    return
  }
  func.func @transform_0(%arg0: i32) -> (i32, i32) {
    %c0_i32 = arith.constant 0 : i32
    %c0_i32_0 = arith.constant 0 : i32
    return %c0_i32, %arg0 : i32, i32
  }
  func.func @transform_1(%arg0: i32) -> (i32, i32) {
    %c0_i32 = arith.constant 0 : i32
    %c0_i32_0 = arith.constant 0 : i32
    %c0_i32_1 = arith.constant 0 : i32
    return %c0_i32, %c0_i32_0 : i32, i32
  }
  func.func @transform_2(%arg0: i32) -> i32 {
    %c0_i32 = arith.constant 0 : i32
    %c0_i32_0 = arith.constant 0 : i32
    return %c0_i32 : i32
  }
  func.func @transform_3(%arg0: i32) -> i32 {
    %c0_i32 = arith.constant 0 : i32
    %c0_i32_0 = arith.constant 0 : i32
    return %c0_i32 : i32
  }
  func.func @transform_4(%arg0: i32) -> i32 {
    %c0_i32 = arith.constant 0 : i32
    %c0_i32_0 = arith.constant 0 : i32
    return %c0_i32 : i32
  }
  func.func @transform_5(%arg0: i32) -> (i32, i32) {
    %c0_i32 = arith.constant 0 : i32
    %c0_i32_0 = arith.constant 0 : i32
    return %c0_i32, %arg0 : i32, i32
  }
}

</mosaic_0001>

<llo_original>
// kernel: squeeze.0
$region0: #{squeeze.0}
  %s0 = inlined_call_operand.vmem [shape: f32[400], index: 0, kind: input, shape index: {}]
  %s1 = inlined_call_operand.hbm [shape: f32[2,200,1], index: 1, kind: output, shape index: {}]
  $region1: #{squeeze.0} parent=0
    #allocation0 [shape = 'u8[2048]{0}', space=vmem, size = 0x800, scoped, tag = 'operand span for operand 1']
    #allocation1 [shape = 's32[1]{0}', space=sflag, size = 0x4, scoped, tag = 'scoped memory for squeeze.0']
    #allocation2 [shape = 'u8[16384]{0}', space=vmem, size = 0x4000, scoped, tag = 'scoped mem for output reshape']
    #allocation3 [shape = 'u8[4096]{0}', space=vmem, size = 0x1000, scoped, tag = 'scoped mem for input reshape']
    %2 = vsyncpa [#allocation1], 0
    %s4 = ssub.s32 16, 1
    %v5 = vld [vmem:[%s0] sm:%s4]
    %6 = vst [vmem:[#allocation3] sm:%s4] %v5
    %s7 = scalar_lea.vmem [#allocation3], 1
    %v8 = vld [vmem:[%s7] sm:$0x1]
    %vm9 = vcmask 588800
    %s10 = scalar_lea.vmem [#allocation2], 8
    %11 = vst.msk [vmem:[%s10] sm:$0x1] %vm9, %v8
    %v12 = vld [vmem:[#allocation3] sm:$0x1]
    %13 = vst [vmem:[#allocation2] sm:$0x1] %v12
    %s14 = scalar_lea.vmem [#allocation3], 1
    %v15 = vld [vmem:[%s14] sm:$0x3]
    %s16 = scalar_lea.vmem [#allocation3], 3
    %v17 = vld [vmem:[%s16] sm:$0x1]
    %vm18 = vcmask 588800
    %v19 = vsel %vm18, %v17, %v15
    %20 = vrot.lane.b32.xlu0 %v19, 56
    %v21 = vpop.permute.xlu0 %20
    %vm22 = vcmask 457728
    %s23 = scalar_lea.vmem [#allocation2], 16
    %24 = vst.msk [vmem:[%s23] ss:$8 sm:$0x3] %vm22, %v21
    %vm25 = vcmask 589248
    %s26 = scalar_lea.vmem [#allocation2], 24
    %27 = vst.msk [vmem:[%s26] sm:$0x1] %vm25, %v21
    %s28 = scalar_lea.vmem [#allocation3], 2
    %v29 = vld [vmem:[%s28] sm:$0x1]
    %30 = vrot.lane.b32.xlu0 %v29, 56
    %v31 = vpop.permute.xlu0 %30
    %vm32 = vcmask 1048000
    %s33 = scalar_lea.vmem [#allocation2], 16
    %34 = vst.msk [vmem:[%s33] sm:$0x1] %vm32, %v31
    %s36 = ssub.s32 2, 1
    %v37 = vld [vmem:[#allocation2] sm:%s36]
    %s39 = ssub.s32 2, 1
    %40 = vst [vmem:[#allocation0] sm:%s39] %v37
    %s41 = scalar_lea.vmem [#allocation2], 8
    %v42 = vld [vmem:[%s41] sm:%s36]
    %s44 = ssub.s32 2, 1
    %s45 = scalar_lea.vmem [#allocation0], 1
    %46 = vst [vmem:[%s45] sm:%s44] %v42
    %s47 = scalar_lea.vmem [#allocation2], 16
    %v48 = vld [vmem:[%s47] sm:%s36]
    %s50 = ssub.s32 2, 1
    %s51 = scalar_lea.vmem [#allocation0], 2
    %52 = vst [vmem:[%s51] sm:%s50] %v48
    %s53 = scalar_lea.vmem [#allocation2], 24
    %v54 = vld [vmem:[%s53] sm:%s36]
    %s56 = ssub.s32 2, 1
    %s57 = scalar_lea.vmem [#allocation0], 3
    %58 = vst [vmem:[%s57] sm:%s56] %v54
    %60 = vsyncadd [#allocation1], 0
    %s62 = sshll.u32 [#allocation0], 4
    %s63 = int_to_ptr.vmem [resolvable:$true] %s62
    %s64 = sshll.u32 %s1, 4
    %s65 = int_to_ptr.hbm [resolvable:$true] %s64
    %67 = dma.vmem_to_hbm [thread:$0]  %s63, 64, %s65, [#allocation1]
    %69 = dma.done [#allocation1], 64
    %70 = vsyncpa [#allocation1], 1

// kernel: net_forward.1
$region0: #{net_forward.1}
  #allocation0 [shape = 'u32[]', space=smem, size = 0x4, offset = 0x4, fixed_abs, tag = 'smem constant byte address 0x4 - core index']
  #allocation1 [shape = 'u32[72,128]{1,0:T(1,128)}', space=vmem, size = 0x9000, scoped, tag = 'internal scratch']
  #allocation2 [shape = 'f32[1]{0:T(128)S(6)}', space=smem, size = 0x200, scoped, tag = 'scoped memory for net_forward.1']
  %s0 = inlined_call_operand.vmem [shape: f32[3,512], index: 0, kind: input, shape index: {}]
  %s1 = inlined_call_operand.vmem [shape: f32[3,16], index: 1, kind: input, shape index: {}]
  %s2 = inlined_call_operand.vmem [shape: f32[16], index: 2, kind: input, shape index: {}]
  %s3 = inlined_call_operand.vmem [shape: f32[16], index: 3, kind: input, shape index: {}]
  %s4 = inlined_call_operand.<no memory space> [shape: f32[1], index: 4, kind: input, shape index: {}]
  %s5 = inlined_call_operand.vmem [shape: f32[1,512], index: 5, kind: output, shape index: {}]
  %s6 = sld [smem:[#allocation0]]
  $region65: #{net_forward.1} parent=0
    _
  %s8 = ssub.s32 1, %s6
  %s9 = scalar_select 0, %s8, %s6
  %10 = sst [smem:[#allocation2]] %s4
  $region1: #{net_forward.1} parent=0
    #allocation3 [shape = 'u8[2048]{0}', space=smem, size = 0x800, scoped, tag = 'input window, operand 1, single buffered']
    #allocation4 [shape = 's32[2]{0}', space=sflag, size = 0x8, scoped, tag = 'scoped memory for net_forward.1']
    #allocation5 [shape = 'u8[512]{0}', space=smem, size = 0x200, scoped, tag = 'input window, operand 2, single buffered']
    #allocation6 [shape = 's32[1]{0}', space=sflag, size = 0x4, scoped, tag = 'scoped memory for net_forward.1']
    #allocation7 [shape = 'u8[512]{0}', space=smem, size = 0x200, scoped, tag = 'input window, operand 3, single buffered']
    %11 = vsyncpa [#allocation4], 0
    %12 = vsyncpa [#allocation6], 0
    loop: start=0, step=1, limit=4
    $region2: #{net_forward.1} parent=1 // loop_pre_header
      _
    $region3: #{net_forward.1} parent=1 // loop_header
      %s14 = sphi 0, %s18
      %p15 = scmp.ge.s32.totalorder %s14, 4
      %s24 = sphi 0, %s26
      %s27 = sphi 0, %s24
      %s28 = sphi 0, %s27
      %s44 = sphi 0, %s28
      %s48 = sphi 0, %s48
      %s50 = sphi 0, %s48
      %s51 = sphi 0, %s50
      %s65 = sphi 0, %s51
      %s69 = sphi 0, %s69
      %s71 = sphi 0, %s69
      %s72 = sphi 0, %s71
      %s86 = sphi 0, %s72
      %s90 = sphi 0, %s90
      %s92 = sphi 0, %s90
      %s93 = sphi 0, %s92
      %s107 = sphi 0, %s93
      %s111 = sphi 0, %s111
      %s113 = sphi 0, %s111
      %s114 = sphi 0, %s113
      %s128 = sphi 0, %s114
      %s134 = sphi 0, %s136
      %s137 = sphi 0, %s134
      %s138 = sphi 0, %s137
      %s154 = sphi 0, %s138
    $region4: #{net_forward.1} parent=1 // loop_header_branch
      %17 = sbr.rel (%p15) target = $region8
    $region5: #{net_forward.1} parent=1 // loop_body
      %s19 = ssub.s32 %s14, 1
      %s20 = ssub.s32 %s14, 2
      %s21 = sadd.s32 %s14, 1
      %s22 = ssub.s32 %s14, %s21
      %p23 = scmp.eq.s32.totalorder %s22, 0
      %s25 = sadd.s32 %s24, 1
      %s26 = scalar_select %p23, %s24, %s25
      %p29 = pneg %p23
      %p30 = scmp.eq.s32.totalorder %s14, 1
      %p31 = por %p29, %p30
      %p32 = scmp.ne.s32.totalorder %s24, %s27
      %p33 = scmp.eq.s32.totalorder %s14, 0
      %p34 = por %p32, %p33
      %p35 = scmp.ne.s32.totalorder %s24, %s27
      %p36 = scmp.eq.s32.totalorder %s19, 1
      %p37 = por %p35, %p36
      %p38 = scmp.ne.s32.totalorder %s27, %s28
      %p39 = scmp.eq.s32.totalorder %s19, 0
      %p40 = por %p38, %p39
      %p41 = scmp.ne.s32.totalorder %s27, %s28
      %p42 = scmp.eq.s32.totalorder %s20, 1
      %p43 = por %p41, %p42
      %p45 = scmp.ne.s32.totalorder %s28, %s44
      %p46 = scmp.eq.s32.totalorder %s20, 0
      %p47 = por %p45, %p46
      %s49 = sadd.s32 %s48, 1
      %p52 = scmp.eq.s32.totalorder %s14, 1
      %p53 = scmp.ne.s32.totalorder %s48, %s50
      %p54 = scmp.eq.s32.totalorder %s14, 0
      %p55 = por %p53, %p54
      %p56 = scmp.ne.s32.totalorder %s48, %s50
      %p57 = scmp.eq.s32.totalorder %s19, 1
      %p58 = por %p56, %p57
      %p59 = scmp.ne.s32.totalorder %s50, %s51
      %p60 = scmp.eq.s32.totalorder %s19, 0
      %p61 = por %p59, %p60
      %p62 = scmp.ne.s32.totalorder %s50, %s51
      %p63 = scmp.eq.s32.totalorder %s20, 1
      %p64 = por %p62, %p63
      %p66 = scmp.ne.s32.totalorder %s51, %s65
      %p67 = scmp.eq.s32.totalorder %s20, 0
      %p68 = por %p66, %p67
      %s70 = sadd.s32 %s69, 1
      %p73 = scmp.eq.s32.totalorder %s14, 1
      %p74 = scmp.ne.s32.totalorder %s69, %s71
      %p75 = scmp.eq.s32.totalorder %s14, 0
      %p76 = por %p74, %p75
      %p77 = scmp.ne.s32.totalorder %s69, %s71
      %p78 = scmp.eq.s32.totalorder %s19, 1
      %p79 = por %p77, %p78
      %p80 = scmp.ne.s32.totalorder %s71, %s72
      %p81 = scmp.eq.s32.totalorder %s19, 0
      %p82 = por %p80, %p81
      %p83 = scmp.ne.s32.totalorder %s71, %s72
      %p84 = scmp.eq.s32.totalorder %s20, 1
      %p85 = por %p83, %p84
      %p87 = scmp.ne.s32.totalorder %s72, %s86
      %p88 = scmp.eq.s32.totalorder %s20, 0
      %p89 = por %p87, %p88
      %s91 = sadd.s32 %s90, 1
      %p94 = scmp.eq.s32.totalorder %s14, 1
      %p95 = scmp.ne.s32.totalorder %s90, %s92
      %p96 = scmp.eq.s32.totalorder %s14, 0
      %p97 = por %p95, %p96
      %p98 = scmp.ne.s32.totalorder %s90, %s92
      %p99 = scmp.eq.s32.totalorder %s19, 1
      %p100 = por %p98, %p99
      %p101 = scmp.ne.s32.totalorder %s92, %s93
      %p102 = scmp.eq.s32.totalorder %s19, 0
      %p103 = por %p101, %p102
      %p104 = scmp.ne.s32.totalorder %s92, %s93
      %p105 = scmp.eq.s32.totalorder %s20, 1
      %p106 = por %p104, %p105
      %p108 = scmp.ne.s32.totalorder %s93, %s107
      %p109 = scmp.eq.s32.totalorder %s20, 0
      %p110 = por %p108, %p109
      %s112 = sadd.s32 %s111, 1
      %p115 = scmp.eq.s32.totalorder %s14, 1
      %p116 = scmp.ne.s32.totalorder %s111, %s113
      %p117 = scmp.eq.s32.totalorder %s14, 0
      %p118 = por %p116, %p117
      %p119 = scmp.ne.s32.totalorder %s111, %s113
      %p120 = scmp.eq.s32.totalorder %s19, 1
      %p121 = por %p119, %p120
      %p122 = scmp.ne.s32.totalorder %s113, %s114
      %p123 = scmp.eq.s32.totalorder %s19, 0
      %p124 = por %p122, %p123
      %p125 = scmp.ne.s32.totalorder %s113, %s114
      %p126 = scmp.eq.s32.totalorder %s20, 1
      %p127 = por %p125, %p126
      %p129 = scmp.ne.s32.totalorder %s114, %s128
      %p130 = scmp.eq.s32.totalorder %s20, 0
      %p131 = por %p129, %p130
      %s132 = ssub.s32 %s14, %s21
      %p133 = scmp.eq.s32.totalorder %s132, 0
      %s135 = sadd.s32 %s134, 1
      %s136 = scalar_select %p133, %s134, %s135
      %p139 = pneg %p133
      %p140 = scmp.eq.s32.totalorder %s14, 1
      %p141 = por %p139, %p140
      %p142 = scmp.ne.s32.totalorder %s134, %s137
      %p143 = scmp.eq.s32.totalorder %s14, 0
      %p144 = por %p142, %p143
      %p145 = scmp.ne.s32.totalorder %s134, %s137
      %p146 = scmp.eq.s32.totalorder %s19, 1
      %p147 = por %p145, %p146
      %p148 = scmp.ne.s32.totalorder %s137, %s138
      %p149 = scmp.eq.s32.totalorder %s19, 0
      %p150 = por %p148, %p149
      %p151 = scmp.ne.s32.totalorder %s137, %s138
      %p152 = scmp.eq.s32.totalorder %s20, 1
      %p153 = por %p151, %p152
      %p155 = scmp.ne.s32.totalorder %s138, %s154
      %p156 = scmp.eq.s32.totalorder %s20, 0
      %p157 = por %p155, %p156
      %p158 = scmp.le.s32.totalorder 1, %s14
      %p159 = scmp.lt.s32.totalorder %s14, 3
      %p160 = pnand %p158, %p159
      %p161 = pneg %p160
      // Predicated region
      $region9: #{net_forward.1} parent=5 // pred_check
        _
      $region10: #{net_forward.1} parent=5 // pred_check_branch
        %163 = sbr.rel (%p160) target = $region12
      $region11: #{net_forward.1} parent=5 // pred_region
        %s164 = ssub.s32 %s14, 1
        // Predicated region
        $region13: #{net_forward.1} parent=11 // pred_check
          %p165 = pneg %p61
        $region14: #{net_forward.1} parent=11 // pred_check_branch
          %167 = sbr.rel (%p165) target = $region16
        $region15: #{net_forward.1} parent=11 // pred_region
          %169 = vsyncadd [#allocation4], 0
          %s171 = sshll.u32 %s1, 4
          %s172 = int_to_ptr.vmem [resolvable:$true] %s171
          %174 = dma.vmem_to_smem %s172, 64, [#allocation3], [#allocation4]
        $region16: #{net_forward.1} parent=11 // pred_fallthru
          _
        // Predicated region
        $region17: #{net_forward.1} parent=11 // pred_check
          %p175 = pneg %p82
        $region18: #{net_forward.1} parent=11 // pred_check_branch
          %177 = sbr.rel (%p175) target = $region20
        $region19: #{net_forward.1} parent=11 // pred_region
          %179 = vsyncadd [#allocation6], 0
          %s181 = sshll.u32 %s2, 4
          %s182 = int_to_ptr.vmem [resolvable:$true] %s181
          %184 = dma.vmem_to_smem %s182, 16, [#allocation5], [#allocation6]
        $region20: #{net_forward.1} parent=11 // pred_fallthru
          _
        // Predicated region
        $region21: #{net_forward.1} parent=11 // pred_check
          %p185 = pneg %p103
        $region22: #{net_forward.1} parent=11 // pred_check_branch
          %187 = sbr.rel (%p185) target = $region24
        $region23: #{net_forward.1} parent=11 // pred_region
          %189 = vsyncadd [#allocation6], 0
          %s191 = sshll.u32 %s3, 4
          %s192 = int_to_ptr.vmem [resolvable:$true] %s191
          %194 = dma.vmem_to_smem %s192, 16, [#allocation7], [#allocation6]
        $region24: #{net_forward.1} parent=11 // pred_fallthru
          _
        // Predicated region
        $region25: #{net_forward.1} parent=11 // pred_check
          %p195 = pneg %p124
        $region26: #{net_forward.1} parent=11 // pred_check_branch
          %197 = sbr.rel (%p195) target = $region28
        $region27: #{net_forward.1} parent=11 // pred_region
          _
        $region28: #{net_forward.1} parent=11 // pred_fallthru
          _
      $region12: #{net_forward.1} parent=5 // pred_fallthru
        _
      %p198 = scmp.lt.s32.totalorder %s14, 2
      // Predicated region
      $region29: #{net_forward.1} parent=5 // pred_check
        %p199 = pneg %p198
      $region30: #{net_forward.1} parent=5 // pred_check_branch
        %201 = sbr.rel (%p199) target = $region32
      $region31: #{net_forward.1} parent=5 // pred_region
        // Predicated region
        $region33: #{net_forward.1} parent=31 // pred_check
          %p202 = pneg %p34
        $region34: #{net_forward.1} parent=31 // pred_check_branch
          %204 = sbr.rel (%p202) target = $region36
        $region35: #{net_forward.1} parent=31 // pred_region
          %s205 = smul.u32 2, %s14
          %p206 = scmp.lt.s32.totalorder %s205, 3
          %s207 = scalar_select %p206, %s205, 3
          %s208 = smul.addr %s207, 4
          %s209 = scalar_lea.vmem %s0, %s208
          %s210 = smul.u32 2, %s14
        $region36: #{net_forward.1} parent=31 // pred_fallthru
          _
      $region32: #{net_forward.1} parent=5 // pred_fallthru
        _
      %p211 = scmp.le.s32.totalorder 1, %s14
      %p212 = scmp.lt.s32.totalorder %s14, 3
      %p213 = pnand %p211, %p212
      %p214 = pneg %p213
      // Predicated region
      $region37: #{net_forward.1} parent=5 // pred_check
        _
      $region38: #{net_forward.1} parent=5 // pred_check_branch
        %216 = sbr.rel (%p213) target = $region40
      $region39: #{net_forward.1} parent=5 // pred_region
        %s217 = ssub.s32 %s14, 1
        // Predicated region
        $region41: #{net_forward.1} parent=39 // pred_check
          %p218 = pneg %p61
        $region42: #{net_forward.1} parent=39 // pred_check_branch
          %220 = sbr.rel (%p218) target = $region44
        $region43: #{net_forward.1} parent=39 // pred_region
          %222 = dma.done [#allocation4], 64
        $region44: #{net_forward.1} parent=39 // pred_fallthru
          _
        // Predicated region
        $region45: #{net_forward.1} parent=39 // pred_check
          %p223 = pneg %p82
        $region46: #{net_forward.1} parent=39 // pred_check_branch
          %225 = sbr.rel (%p223) target = $region48
        $region47: #{net_forward.1} parent=39 // pred_region
          %227 = dma.done [#allocation6], 16
        $region48: #{net_forward.1} parent=39 // pred_fallthru
          _
        // Predicated region
        $region49: #{net_forward.1} parent=39 // pred_check
          %p228 = pneg %p103
        $region50: #{net_forward.1} parent=39 // pred_check_branch
          %230 = sbr.rel (%p228) target = $region52
        $region51: #{net_forward.1} parent=39 // pred_region
          %232 = dma.done [#allocation6], 16
        $region52: #{net_forward.1} parent=39 // pred_fallthru
          _
        %233 = sfence
        %s234 = smul.u32 2, %s19
        %p235 = scmp.lt.s32.totalorder %s234, 3
        %s236 = scalar_select %p235, %s234, 3
        %s237 = smul.addr %s236, 4
        %s238 = scalar_lea.vmem %s0, %s237
        %p239 = pneg %p40
        %p240 = pneg %p37
        %p241 = pneg %p61
        %p242 = pneg %p58
        %p243 = pneg %p82
        %p244 = pneg %p79
        %p245 = pneg %p103
        %p246 = pneg %p100
        %p247 = pneg %p124
        %p248 = pneg %p121
        %p249 = pneg %p150
        %p250 = pneg %p147
        %s251 = smul.u32 2, %s19
        %p252 = scmp.lt.s32.totalorder %s251, 3
        %s253 = scalar_select %p252, %s251, 3
        %s254 = scalar_lea.vmem %s5, %s253
        %s255 = smul.u32 2, %s19
        %p256 = scmp.lt.s32.totalorder %s255, 3
        %s257 = scalar_select %p256, %s255, 3
        %s258 = smul.addr %s257, 4
        %s259 = scalar_lea.vmem %s0, %s258
        %s260 = smul.u32 2, %s19
        %s261 = smul.u32 2, %s19
        %p262 = scmp.lt.s32.totalorder %s261, 3
        %s263 = scalar_select %p262, %s261, 3
        %s264 = scalar_lea.vmem %s5, %s263
        %s265 = smul.u32 2, %s19
        %v266 = vld [vmem:[%s259] ss:$4 sm:$0x3]
        %s267 = scalar_lea.vmem %s259, 1
        %v268 = vld [vmem:[%s267] ss:$4 sm:$0x3]
        %s269 = scalar_lea.vmem %s259, 2
        %v270 = vld [vmem:[%s269] ss:$4 sm:$0x3]
        %s271 = sld [smem:[#allocation3]]
        %v272 = vstv %s271
        %v273 = vmul.f32 %v266, %v272
        %s274 = sld [smem:[#allocation3 + $0x80]]
        %v275 = vstv %s274
        %v276 = vmul.f32 %v268, %v275
        %v277 = vadd.f32 %v273, %v276
        %s278 = sld [smem:[#allocation3 + $0x100]]
        %v279 = vstv %s278
        %v280 = vmul.f32 %v270, %v279
        %v281 = vadd.f32 %v277, %v280
        %s282 = sld [smem:[#allocation5]]
        %v283 = vstv %s282
        %v284 = vadd.f32 %v281, %v283
        %v285 = vmax.f32 %v284, 0.0
        %s286 = sld [smem:[#allocation7]]
        %v287 = vstv %s286
        %v288 = vmul.f32 %v285, %v287
        %v289 = vadd.f32 %v288, 0.0
        %s290 = sld [smem:[#allocation3 + $0x1]]
        %v291 = vstv %s290
        %v292 = vmul.f32 %v266, %v291
        %s293 = sld [smem:[#allocation3 + $0x81]]
        %v294 = vstv %s293
        %v295 = vmul.f32 %v268, %v294
        %v296 = vadd.f32 %v292, %v295
        %s297 = sld [smem:[#allocation3 + $0x101]]
        %v298 = vstv %s297
        %v299 = vmul.f32 %v270, %v298
        %v300 = vadd.f32 %v296, %v299
        %s301 = sld [smem:[#allocation5 + $0x1]]
        %v302 = vstv %s301
        %v303 = vadd.f32 %v300, %v302
        %v304 = vmax.f32 %v303, 0.0
        %s305 = sld [smem:[#allocation7 + $0x1]]
        %v306 = vstv %s305
        %v307 = vmul.f32 %v304, %v306
        %v308 = vadd.f32 %v289, %v307
        %s309 = sld [smem:[#allocation3 + $0x2]]
        %v310 = vstv %s309
        %v311 = vmul.f32 %v266, %v310
        %s312 = sld [smem:[#allocation3 + $0x82]]
        %v313 = vstv %s312
        %v314 = vmul.f32 %v268, %v313
        %v315 = vadd.f32 %v311, %v314
        %s316 = sld [smem:[#allocation3 + $0x102]]
        %v317 = vstv %s316
        %v318 = vmul.f32 %v270, %v317
        %v319 = vadd.f32 %v315, %v318
        %s320 = sld [smem:[#allocation5 + $0x2]]
        %v321 = vstv %s320
        %v322 = vadd.f32 %v319, %v321
        %v323 = vmax.f32 %v322, 0.0
        %s324 = sld [smem:[#allocation7 + $0x2]]
        %v325 = vstv %s324
        %v326 = vmul.f32 %v323, %v325
        %v327 = vadd.f32 %v308, %v326
        %s328 = sld [smem:[#allocation3 + $0x3]]
        %v329 = vstv %s328
        %v330 = vmul.f32 %v266, %v329
        %s331 = sld [smem:[#allocation3 + $0x83]]
        %v332 = vstv %s331
        %v333 = vmul.f32 %v268, %v332
        %v334 = vadd.f32 %v330, %v333
        %s335 = sld [smem:[#allocation3 + $0x103]]
        %v336 = vstv %s335
        %v337 = vmul.f32 %v270, %v336
        %v338 = vadd.f32 %v334, %v337
        %s339 = sld [smem:[#allocation5 + $0x3]]
        %v340 = vstv %s339
        %v341 = vadd.f32 %v338, %v340
        %v342 = vmax.f32 %v341, 0.0
        %s343 = sld [smem:[#allocation7 + $0x3]]
        %v344 = vstv %s343
        %v345 = vmul.f32 %v342, %v344
        %v346 = vadd.f32 %v327, %v345
        %s347 = sld [smem:[#allocation3 + $0x4]]
        %v348 = vstv %s347
        %v349 = vmul.f32 %v266, %v348
        %s350 = sld [smem:[#allocation3 + $0x84]]
        %v351 = vstv %s350
        %v352 = vmul.f32 %v268, %v351
        %v353 = vadd.f32 %v349, %v352
        %s354 = sld [smem:[#allocation3 + $0x104]]
        %v355 = vstv %s354
        %v356 = vmul.f32 %v270, %v355
        %v357 = vadd.f32 %v353, %v356
        %s358 = sld [smem:[#allocation5 + $0x4]]
        %v359 = vstv %s358
        %v360 = vadd.f32 %v357, %v359
        %v361 = vmax.f32 %v360, 0.0
        %s362 = sld [smem:[#allocation7 + $0x4]]
        %v363 = vstv %s362
        %v364 = vmul.f32 %v361, %v363
        %v365 = vadd.f32 %v346, %v364
        %s366 = sld [smem:[#allocation3 + $0x5]]
        %v367 = vstv %s366
        %v368 = vmul.f32 %v266, %v367
        %s369 = sld [smem:[#allocation3 + $0x85]]
        %v370 = vstv %s369
        %v371 = vmul.f32 %v268, %v370
        %v372 = vadd.f32 %v368, %v371
        %s373 = sld [smem:[#allocation3 + $0x105]]
        %v374 = vstv %s373
        %v375 = vmul.f32 %v270, %v374
        %v376 = vadd.f32 %v372, %v375
        %s377 = sld [smem:[#allocation5 + $0x5]]
        %v378 = vstv %s377
        %v379 = vadd.f32 %v376, %v378
        %v380 = vmax.f32 %v379, 0.0
        %s381 = sld [smem:[#allocation7 + $0x5]]
        %v382 = vstv %s381
        %v383 = vmul.f32 %v380, %v382
        %v384 = vadd.f32 %v365, %v383
        %s385 = sld [smem:[#allocation3 + $0x6]]
        %v386 = vstv %s385
        %v387 = vmul.f32 %v266, %v386
        %s388 = sld [smem:[#allocation3 + $0x86]]
        %v389 = vstv %s388
        %v390 = vmul.f32 %v268, %v389
        %v391 = vadd.f32 %v387, %v390
        %s392 = sld [smem:[#allocation3 + $0x106]]
        %v393 = vstv %s392
        %v394 = vmul.f32 %v270, %v393
        %v395 = vadd.f32 %v391, %v394
        %s396 = sld [smem:[#allocation5 + $0x6]]
        %v397 = vstv %s396
        %v398 = vadd.f32 %v395, %v397
        %v399 = vmax.f32 %v398, 0.0
        %s400 = sld [smem:[#allocation7 + $0x6]]
        %v401 = vstv %s400
        %v402 = vmul.f32 %v399, %v401
        %v403 = vadd.f32 %v384, %v402
        %s404 = sld [smem:[#allocation3 + $0x7]]
        %v405 = vstv %s404
        %v406 = vmul.f32 %v266, %v405
        %s407 = sld [smem:[#allocation3 + $0x87]]
        %v408 = vstv %s407
        %v409 = vmul.f32 %v268, %v408
        %v410 = vadd.f32 %v406, %v409
        %s411 = sld [smem:[#allocation3 + $0x107]]
        %v412 = vstv %s411
        %v413 = vmul.f32 %v270, %v412
        %v414 = vadd.f32 %v410, %v413
        %s415 = sld [smem:[#allocation5 + $0x7]]
        %v416 = vstv %s415
        %v417 = vadd.f32 %v414, %v416
        %v418 = vmax.f32 %v417, 0.0
        %s419 = sld [smem:[#allocation7 + $0x7]]
        %v420 = vstv %s419
        %v421 = vmul.f32 %v418, %v420
        %v422 = vadd.f32 %v403, %v421
        %s423 = sld [smem:[#allocation3 + $0x8]]
        %v424 = vstv %s423
        %v425 = vmul.f32 %v266, %v424
        %s426 = sld [smem:[#allocation3 + $0x88]]
        %v427 = vstv %s426
        %v428 = vmul.f32 %v268, %v427
        %v429 = vadd.f32 %v425, %v428
        %s430 = sld [smem:[#allocation3 + $0x108]]
        %v431 = vstv %s430
        %v432 = vmul.f32 %v270, %v431
        %v433 = vadd.f32 %v429, %v432
        %s434 = sld [smem:[#allocation5 + $0x8]]
        %v435 = vstv %s434
        %v436 = vadd.f32 %v433, %v435
        %v437 = vmax.f32 %v436, 0.0
        %s438 = sld [smem:[#allocation7 + $0x8]]
        %v439 = vstv %s438
        %v440 = vmul.f32 %v437, %v439
        %v441 = vadd.f32 %v422, %v440
        %s442 = sld [smem:[#allocation3 + $0x9]]
        %v443 = vstv %s442
        %v444 = vmul.f32 %v266, %v443
        %s445 = sld [smem:[#allocation3 + $0x89]]
        %v446 = vstv %s445
        %v447 = vmul.f32 %v268, %v446
        %v448 = vadd.f32 %v444, %v447
        %s449 = sld [smem:[#allocation3 + $0x109]]
        %v450 = vstv %s449
        %v451 = vmul.f32 %v270, %v450
        %v452 = vadd.f32 %v448, %v451
        %s453 = sld [smem:[#allocation5 + $0x9]]
        %v454 = vstv %s453
        %v455 = vadd.f32 %v452, %v454
        %v456 = vmax.f32 %v455, 0.0
        %s457 = sld [smem:[#allocation7 + $0x9]]
        %v458 = vstv %s457
        %v459 = vmul.f32 %v456, %v458
        %v460 = vadd.f32 %v441, %v459
        %s461 = sld [smem:[#allocation3 + $0xa]]
        %v462 = vstv %s461
        %v463 = vmul.f32 %v266, %v462
        %s464 = sld [smem:[#allocation3 + $0x8a]]
        %v465 = vstv %s464
        %v466 = vmul.f32 %v268, %v465
        %v467 = vadd.f32 %v463, %v466
        %s468 = sld [smem:[#allocation3 + $0x10a]]
        %v469 = vstv %s468
        %v470 = vmul.f32 %v270, %v469
        %v471 = vadd.f32 %v467, %v470
        %s472 = sld [smem:[#allocation5 + $0xa]]
        %v473 = vstv %s472
        %v474 = vadd.f32 %v471, %v473
        %v475 = vmax.f32 %v474, 0.0
        %s476 = sld [smem:[#allocation7 + $0xa]]
        %v477 = vstv %s476
        %v478 = vmul.f32 %v475, %v477
        %v479 = vadd.f32 %v460, %v478
        %s480 = sld [smem:[#allocation3 + $0xb]]
        %v481 = vstv %s480
        %v482 = vmul.f32 %v266, %v481
        %s483 = sld [smem:[#allocation3 + $0x8b]]
        %v484 = vstv %s483
        %v485 = vmul.f32 %v268, %v484
        %v486 = vadd.f32 %v482, %v485
        %s487 = sld [smem:[#allocation3 + $0x10b]]
        %v488 = vstv %s487
        %v489 = vmul.f32 %v270, %v488
        %v490 = vadd.f32 %v486, %v489
        %s491 = sld [smem:[#allocation5 + $0xb]]
        %v492 = vstv %s491
        %v493 = vadd.f32 %v490, %v492
        %v494 = vmax.f32 %v493, 0.0
        %s495 = sld [smem:[#allocation7 + $0xb]]
        %v496 = vstv %s495
        %v497 = vmul.f32 %v494, %v496
        %v498 = vadd.f32 %v479, %v497
        %s499 = sld [smem:[#allocation3 + $0xc]]
        %v500 = vstv %s499
        %v501 = vmul.f32 %v266, %v500
        %s502 = sld [smem:[#allocation3 + $0x8c]]
        %v503 = vstv %s502
        %v504 = vmul.f32 %v268, %v503
        %v505 = vadd.f32 %v501, %v504
        %s506 = sld [smem:[#allocation3 + $0x10c]]
        %v507 = vstv %s506
        %v508 = vmul.f32 %v270, %v507
        %v509 = vadd.f32 %v505, %v508
        %s510 = sld [smem:[#allocation5 + $0xc]]
        %v511 = vstv %s510
        %v512 = vadd.f32 %v509, %v511
        %v513 = vmax.f32 %v512, 0.0
        %s514 = sld [smem:[#allocation7 + $0xc]]
        %v515 = vstv %s514
        %v516 = vmul.f32 %v513, %v515
        %v517 = vadd.f32 %v498, %v516
        %s518 = sld [smem:[#allocation3 + $0xd]]
        %v519 = vstv %s518
        %v520 = vmul.f32 %v266, %v519
        %s521 = sld [smem:[#allocation3 + $0x8d]]
        %v522 = vstv %s521
        %v523 = vmul.f32 %v268, %v522
        %v524 = vadd.f32 %v520, %v523
        %s525 = sld [smem:[#allocation3 + $0x10d]]
        %v526 = vstv %s525
        %v527 = vmul.f32 %v270, %v526
        %v528 = vadd.f32 %v524, %v527
        %s529 = sld [smem:[#allocation5 + $0xd]]
        %v530 = vstv %s529
        %v531 = vadd.f32 %v528, %v530
        %v532 = vmax.f32 %v531, 0.0
        %s533 = sld [smem:[#allocation7 + $0xd]]
        %v534 = vstv %s533
        %v535 = vmul.f32 %v532, %v534
        %v536 = vadd.f32 %v517, %v535
        %s537 = sld [smem:[#allocation3 + $0xe]]
        %v538 = vstv %s537
        %v539 = vmul.f32 %v266, %v538
        %s540 = sld [smem:[#allocation3 + $0x8e]]
        %v541 = vstv %s540
        %v542 = vmul.f32 %v268, %v541
        %v543 = vadd.f32 %v539, %v542
        %s544 = sld [smem:[#allocation3 + $0x10e]]
        %v545 = vstv %s544
        %v546 = vmul.f32 %v270, %v545
        %v547 = vadd.f32 %v543, %v546
        %s548 = sld [smem:[#allocation5 + $0xe]]
        %v549 = vstv %s548
        %v550 = vadd.f32 %v547, %v549
        %v551 = vmax.f32 %v550, 0.0
        %s552 = sld [smem:[#allocation7 + $0xe]]
        %v553 = vstv %s552
        %v554 = vmul.f32 %v551, %v553
        %v555 = vadd.f32 %v536, %v554
        %s556 = sld [smem:[#allocation3 + $0xf]]
        %v557 = vstv %s556
        %v558 = vmul.f32 %v266, %v557
        %s559 = sld [smem:[#allocation3 + $0x8f]]
        %v560 = vstv %s559
        %v561 = vmul.f32 %v268, %v560
        %v562 = vadd.f32 %v558, %v561
        %s563 = sld [smem:[#allocation3 + $0x10f]]
        %v564 = vstv %s563
        %v565 = vmul.f32 %v270, %v564
        %v566 = vadd.f32 %v562, %v565
        %s567 = sld [smem:[#allocation5 + $0xf]]
        %v568 = vstv %s567
        %v569 = vadd.f32 %v566, %v568
        %v570 = vmax.f32 %v569, 0.0
        %s571 = sld [smem:[#allocation7 + $0xf]]
        %v572 = vstv %s571
        %v573 = vmul.f32 %v570, %v572
        %v574 = vadd.f32 %v555, %v573
        %s575 = sld [smem:[#allocation2]]
        %v576 = vstv %s575
        %v577 = vadd.f32 %v574, %v576
        %v578 = vlaneseq
        %vm579 = vcmp.ge.s32.totalorder %v578, 0
        %vm580 = vcmp.lt.s32.totalorder %v578, 256
        %vm581 = vmand %vm579, %vm580
        %582 = vst.msk [vmem:[%s264] sm:$0x3] %vm581, %v577
        %s583 = smul.u32 2, %s19
        %p584 = scmp.lt.s32.totalorder %s583, 3
        %s585 = scalar_select %p584, %s583, 3
        %s586 = scalar_lea.vmem %s5, %s585
        // Predicated region
        $region53: #{net_forward.1} parent=39 // pred_check
          %p587 = pneg %p147
        $region54: #{net_forward.1} parent=39 // pred_check_branch
          %589 = sbr.rel (%p587) target = $region56
        $region55: #{net_forward.1} parent=39 // pred_region
          %s590 = smul.u32 2, %s19
        $region56: #{net_forward.1} parent=39 // pred_fallthru
          _
      $region40: #{net_forward.1} parent=5 // pred_fallthru
        _
      %p591 = scmp.le.s32.totalorder 2, %s14
      // Predicated region
      $region57: #{net_forward.1} parent=5 // pred_check
        %p592 = pneg %p591
      $region58: #{net_forward.1} parent=5 // pred_check_branch
        %594 = sbr.rel (%p592) target = $region60
      $region59: #{net_forward.1} parent=5 // pred_region
        %s595 = ssub.s32 %s14, 2
        // Predicated region
        $region61: #{net_forward.1} parent=59 // pred_check
          %p596 = pneg %p153
        $region62: #{net_forward.1} parent=59 // pred_check_branch
          %598 = sbr.rel (%p596) target = $region64
        $region63: #{net_forward.1} parent=59 // pred_region
          %s599 = smul.u32 2, %s20
          %p600 = scmp.lt.s32.totalorder %s599, 3
          %s601 = scalar_select %p600, %s599, 3
          %s602 = scalar_lea.vmem %s5, %s601
        $region64: #{net_forward.1} parent=59 // pred_fallthru
          _
      $region60: #{net_forward.1} parent=5 // pred_fallthru
        _
    $region6: #{net_forward.1} parent=1 // loop_footer
      %s18 = sadd.s32 1, %s14
    $region7: #{net_forward.1} parent=1 // loop_footer_branch
      %13 = sbr.rel target = $region3
    $region8: #{net_forward.1} parent=1 // loop_exit
      _
    %603 = vsyncpa [#allocation4], 1
    %s604 = scalar_lea.sflag [#allocation4], 1
    %605 = vsyncpa %s604, 1
    %606 = vsyncpa [#allocation6], 1

</llo_original>
